<compile_context>
chip_gen: v7x
topology: tpu7x:2x2x1
jax: 0.10.0
libtpu: 0.0.40
codegen_flags: <defaults>
</compile_context>

<pallas_src>
import functools
import math

import jax
import jax.numpy as jnp
from jax.experimental import pallas as pl
from jax.experimental.pallas import tpu as pltpu

LANE = 128


def _round_up(n, m):
    return ((n + m - 1) // m) * m


def _pad2(a, rows, cols):
    return jnp.pad(a, ((0, rows - a.shape[0]), (0, cols - a.shape[1])))


def _tpu_config():
    """Generation-aware (elementwise dtype, batch-tile cap, vmem limit)."""
    try:
        kind = jax.devices()[0].device_kind.lower()
    except Exception:  # pragma: no cover - CPU/interpret fallback
        kind = ""
    if "v4" in kind or "v5" in kind:
        # No bf16 VPU on v4/v5-class chips: keep elementwise in f32.
        # v5e scoped-VMEM default is 16 MiB -> raise it explicitly.
        return jnp.float32, 2048, 64 << 20
    if "v7" in kind:
        # v7x: 64 MiB physical VMEM per TC -> smaller cap / limit.
        return jnp.bfloat16, 4096, 48 << 20
    # v6e and default.
    return jnp.bfloat16, 4096, 64 << 20


def mlp_kernel(x_ref, w1_ref, b1_ref, w2_ref, b2_ref, w3_ref, b3_ref, o_ref,
               *, ew_dtype):
    # Cast x to bf16 in-kernel (VPU has slack; avoids a wrapper-side XLA pass).
    x = x_ref[...].astype(jnp.bfloat16)
    # Layer 1: Linear(input_size, 64 -> 128 padded) + ReLU.
    h1 = jnp.dot(x, w1_ref[...], preferred_element_type=jnp.float32)
    h1 = jnp.maximum(h1.astype(ew_dtype) + b1_ref[...], 0).astype(jnp.bfloat16)
    # Layer 2: Linear(64, 32) (padded 128x128) + ReLU.
    h2 = jnp.dot(h1, w2_ref[...], preferred_element_type=jnp.float32)
    h2 = jnp.maximum(h2.astype(ew_dtype) + b2_ref[...], 0).astype(jnp.bfloat16)
    # Layer 3: Linear(32, output_size), no activation.  Narrow N output.
    out = jnp.dot(h2, w3_ref[...], preferred_element_type=jnp.float32)
    o_ref[...] = out + b3_ref[...]


def prepare_params(params, *, ew_dtype=jnp.float32):
    """Pad hidden dims to 128, cast weights to bf16. Call ONCE per model."""
    w1, b1, w2, b2, w3, b3 = params
    in_f = w1.shape[0]
    hid = LANE  # 64 and 32 both pad up to 128
    out_f = w3.shape[1]
    w1p = _pad2(w1, in_f, hid).astype(jnp.bfloat16)
    b1p = _pad2(b1.reshape(1, -1), 1, hid).astype(ew_dtype)   # padded lanes == 0 exactly
    w2p = _pad2(w2, hid, hid).astype(jnp.bfloat16)
    b2p = _pad2(b2.reshape(1, -1), 1, hid).astype(ew_dtype)
    w3p = _pad2(w3, hid, out_f).astype(jnp.bfloat16)          # only K-dim padded
    b3p = b3.reshape(1, -1).astype(jnp.float32)
    return (w1p, b1p, w2p, b2p, w3p, b3p)


def mlp_classifier_forward(x, prepared_params, *, ew_dtype, tile_b, vmem_limit_bytes):
    w1p, b1p, w2p, b2p, w3p, b3p = prepared_params
    batch, in_f = x.shape
    hid = w1p.shape[1]
    out_f = w3p.shape[1]

    # Batch tile: multiple of 8 sublanes, capped by generation-aware budget.
    tb = min(tile_b, _round_up(batch, 8))
    # Pad batch only to a sublane multiple; partial last tiles are handled by
    # Pallas (OOB reads padded with unspecified rows, OOB writes dropped).
    batch_pad = _round_up(batch, 8)
    xp = x if batch_pad == batch else jnp.pad(x, ((0, batch_pad - batch), (0, 0)))
    n_tiles = pl.cdiv(batch_pad, tb)

    flops = 2 * batch_pad * (in_f * 64 + 64 * 32 + 32 * out_f)
    bytes_accessed = int(
        xp.size * xp.dtype.itemsize
        + sum(int(p.size) * p.dtype.itemsize for p in prepared_params)
        + batch_pad * out_f * 4)

    out = pl.pallas_call(
        functools.partial(mlp_kernel, ew_dtype=ew_dtype),
        out_shape=jax.ShapeDtypeStruct((batch_pad, out_f), jnp.float32),
        grid_spec=pltpu.PrefetchScalarGridSpec(
            num_scalar_prefetch=0,
            grid=(n_tiles,),
            in_specs=[
                pl.BlockSpec((tb, in_f), lambda i: (i, 0)),       # x tile (f32)
                pl.BlockSpec((in_f, hid), lambda i: (0, 0)),      # w1 (resident)
                pl.BlockSpec((1, hid), lambda i: (0, 0)),         # b1
                pl.BlockSpec((hid, hid), lambda i: (0, 0)),       # w2
                pl.BlockSpec((1, hid), lambda i: (0, 0)),         # b2
                pl.BlockSpec((hid, out_f), lambda i: (0, 0)),     # w3 (narrow N)
                pl.BlockSpec((1, out_f), lambda i: (0, 0)),       # b3
            ],
            out_specs=pl.BlockSpec((tb, out_f), lambda i: (i, 0)),  # narrow output
        ),
        compiler_params=pltpu.CompilerParams(
            dimension_semantics=("parallel",),
            vmem_limit_bytes=vmem_limit_bytes),
        cost_estimate=pl.CostEstimate(
            flops=flops, transcendentals=0, bytes_accessed=bytes_accessed),
    )(xp, w1p, b1p, w2p, b2p, w3p, b3p)

    return out if batch_pad == batch else out[:batch]


def init_linear(key, fan_in, fan_out):
    """Deterministic init mirroring torch.nn.Linear defaults (Kaiming uniform)."""
    k_w, k_b = jax.random.split(key)
    bound_w = math.sqrt(1.0 / fan_in) * math.sqrt(3.0)  # kaiming_uniform a=sqrt(5)
    w = jax.random.uniform(k_w, (fan_in, fan_out), jnp.float32, -bound_w, bound_w)
    bound_b = 1.0 / math.sqrt(fan_in)
    b = jax.random.uniform(k_b, (1, fan_out), jnp.float32, -bound_b, bound_b)
    return w, b


def reference_forward_like_kernel(x, params, ew_dtype):
    """bf16-operand / f32-accumulate reference mirroring the kernel arithmetic."""
    w1, b1, w2, b2, w3, b3 = params
    xb = x.astype(jnp.bfloat16)
    h1 = jnp.dot(xb, w1.astype(jnp.bfloat16), preferred_element_type=jnp.float32)
    h1 = jnp.maximum(h1.astype(ew_dtype) + b1.astype(ew_dtype), 0).astype(jnp.bfloat16)
    h2 = jnp.dot(h1, w2.astype(jnp.bfloat16), preferred_element_type=jnp.float32)
    h2 = jnp.maximum(h2.astype(ew_dtype) + b2.astype(ew_dtype), 0).astype(jnp.bfloat16)
    out = jnp.dot(h2, w3.astype(jnp.bfloat16), preferred_element_type=jnp.float32)
    return out + b3


if __name__ == "__main__":
    input_size = 32
    output_size = 10
    batch = 8

    key = jax.random.PRNGKey(0)
    kx, k1, k2, k3 = jax.random.split(key, 4)

    x = jax.random.normal(kx, (batch, input_size), jnp.float32)
    w1, b1 = init_linear(k1, input_size, 64)
    w2, b2 = init_linear(k2, 64, 32)
    w3, b3 = init_linear(k3, 32, output_size)
    params = (w1, b1, w2, b2, w3, b3)

    ew_dtype, tile_cap, vmem_limit = _tpu_config()
    # Hoisted: pad + cast weights once, outside the per-call forward path.
    prepared = prepare_params(params, ew_dtype=ew_dtype)

    out = mlp_classifier_forward(x, prepared, ew_dtype=ew_dtype,
                                 tile_b=tile_cap, vmem_limit_bytes=vmem_limit)
    out = jax.block_until_ready(out)
    assert out.shape == (batch, output_size)

    # Reference mirroring the kernel's arithmetic (bf16 MXU, f32 accumulation,
    # generation-matched elementwise dtype).
    ref_bf16 = reference_forward_like_kernel(x, params, ew_dtype)
    assert jnp.allclose(out, ref_bf16, atol=2e-3, rtol=2e-3)

    # Loose check against the pure f32 PyTorch-style forward (bf16 MXU operands
    # introduce ~0.4% relative error per matmul).
    h1f = jnp.maximum(x @ w1 + b1, 0.0)
    h2f = jnp.maximum(h1f @ w2 + b2, 0.0)
    ref_f32 = h2f @ w3 + b3
    assert jnp.allclose(out, ref_f32, atol=1e-1, rtol=1e-1)

    print("KERNEL_OK")
</pallas_src>

<mosaic_0001>
module attributes {stable_mosaic.version = 11 : i64} {
  func.func @mlp_kernel(%arg0: i32, %arg1: memref<8x32xf32, #tpu.memory_space<vmem>>, %arg2: memref<32x128xbf16, #tpu.memory_space<vmem>>, %arg3: memref<1x128xbf16, #tpu.memory_space<vmem>>, %arg4: memref<128x128xbf16, #tpu.memory_space<vmem>>, %arg5: memref<1x128xbf16, #tpu.memory_space<vmem>>, %arg6: memref<128x10xbf16, #tpu.memory_space<vmem>>, %arg7: memref<1x10xf32, #tpu.memory_space<vmem>>, %arg8: memref<8x10xf32, #tpu.memory_space<vmem>>) attributes {dimension_semantics = [#tpu.dimension_semantics<parallel>], iteration_bounds = array<i64: 1>, scalar_prefetch = 0 : i64, scratch_operands = 0 : i64, tpu.core_type = #tpu.core_type<tc>, window_params = [{transform_indices = @transform_0, window_bounds = array<i64: 8, 32>}, {pipeline_mode = #tpu.pipeline_mode<synchronous>, transform_indices = @transform_1, window_bounds = array<i64: 32, 128>}, {pipeline_mode = #tpu.pipeline_mode<synchronous>, transform_indices = @transform_2, window_bounds = array<i64: 1, 128>}, {pipeline_mode = #tpu.pipeline_mode<synchronous>, transform_indices = @transform_3, window_bounds = array<i64: 128, 128>}, {pipeline_mode = #tpu.pipeline_mode<synchronous>, transform_indices = @transform_4, window_bounds = array<i64: 1, 128>}, {pipeline_mode = #tpu.pipeline_mode<synchronous>, transform_indices = @transform_5, window_bounds = array<i64: 128, 10>}, {pipeline_mode = #tpu.pipeline_mode<synchronous>, transform_indices = @transform_6, window_bounds = array<i64: 1, 10>}, {transform_indices = @transform_7, window_bounds = array<i64: 8, 10>}]} {
    %c0 = arith.constant 0 : index
    %c0_0 = arith.constant 0 : index
    %0 = vector.load %arg1[%c0, %c0_0] : memref<8x32xf32, #tpu.memory_space<vmem>>, vector<8x32xf32>
    %1 = arith.truncf %0 : vector<8x32xf32> to vector<8x32xbf16>
    %c0_1 = arith.constant 0 : index
    %c0_2 = arith.constant 0 : index
    %2 = vector.load %arg2[%c0_1, %c0_2] : memref<32x128xbf16, #tpu.memory_space<vmem>>, vector<32x128xbf16>
    %cst = arith.constant dense<0.000000e+00> : vector<8x128xf32>
    %3 = tpu.matmul %1, %2, %cst {dimension_numbers = #tpu.dot_dimension_numbers<[1], [0], [0], [1], [0, 0, 1, 1], [], []>} : vector<8x32xbf16>, vector<32x128xbf16>, vector<8x128xf32> -> vector<8x128xf32>
    %4 = arith.truncf %3 : vector<8x128xf32> to vector<8x128xbf16>
    %c0_3 = arith.constant 0 : index
    %c0_4 = arith.constant 0 : index
    %5 = vector.load %arg3[%c0_3, %c0_4] : memref<1x128xbf16, #tpu.memory_space<vmem>>, vector<1x128xbf16>
    %6 = vector.broadcast %5 : vector<1x128xbf16> to vector<8x128xbf16>
    %7 = arith.addf %4, %6 : vector<8x128xbf16>
    %cst_5 = arith.constant 0.000000e+00 : bf16
    %8 = vector.broadcast %cst_5 : bf16 to vector<8x128xbf16>
    %9 = arith.maximumf %7, %8 : vector<8x128xbf16>
    %c0_6 = arith.constant 0 : index
    %c0_7 = arith.constant 0 : index
    %10 = vector.load %arg4[%c0_6, %c0_7] : memref<128x128xbf16, #tpu.memory_space<vmem>>, vector<128x128xbf16>
    %cst_8 = arith.constant dense<0.000000e+00> : vector<8x128xf32>
    %11 = tpu.matmul %9, %10, %cst_8 {dimension_numbers = #tpu.dot_dimension_numbers<[1], [0], [0], [1], [0, 0, 1, 1], [], []>} : vector<8x128xbf16>, vector<128x128xbf16>, vector<8x128xf32> -> vector<8x128xf32>
    %12 = arith.truncf %11 : vector<8x128xf32> to vector<8x128xbf16>
    %c0_9 = arith.constant 0 : index
    %c0_10 = arith.constant 0 : index
    %13 = vector.load %arg5[%c0_9, %c0_10] : memref<1x128xbf16, #tpu.memory_space<vmem>>, vector<1x128xbf16>
    %14 = vector.broadcast %13 : vector<1x128xbf16> to vector<8x128xbf16>
    %15 = arith.addf %12, %14 : vector<8x128xbf16>
    %cst_11 = arith.constant 0.000000e+00 : bf16
    %16 = vector.broadcast %cst_11 : bf16 to vector<8x128xbf16>
    %17 = arith.maximumf %15, %16 : vector<8x128xbf16>
    %c0_12 = arith.constant 0 : index
    %c0_13 = arith.constant 0 : index
    %18 = vector.load %arg6[%c0_12, %c0_13] : memref<128x10xbf16, #tpu.memory_space<vmem>>, vector<128x10xbf16>
    %cst_14 = arith.constant dense<0.000000e+00> : vector<8x10xf32>
    %19 = tpu.matmul %17, %18, %cst_14 {dimension_numbers = #tpu.dot_dimension_numbers<[1], [0], [0], [1], [0, 0, 1, 1], [], []>} : vector<8x128xbf16>, vector<128x10xbf16>, vector<8x10xf32> -> vector<8x10xf32>
    %c0_15 = arith.constant 0 : index
    %c0_16 = arith.constant 0 : index
    %20 = vector.load %arg7[%c0_15, %c0_16] : memref<1x10xf32, #tpu.memory_space<vmem>>, vector<1x10xf32>
    %21 = vector.broadcast %20 : vector<1x10xf32> to vector<8x10xf32>
    %22 = arith.addf %19, %21 : vector<8x10xf32>
    %c0_17 = arith.constant 0 : index
    %c0_18 = arith.constant 0 : index
    %23 = vector.load %arg8[%c0_17, %c0_18] : memref<8x10xf32, #tpu.memory_space<vmem>>, vector<8x10xf32>
    tpu.vector_store %arg8[%c0_17, %c0_18], %22 {strides = array<i32>} : memref<8x10xf32, #tpu.memory_space<vmem>>, vector<8x10xf32>,
    return
  }
  func.func @transform_0(%arg0: i32) -> (i32, i32) {
    %c0_i32 = arith.constant 0 : i32
    %c0_i32_0 = arith.constant 0 : i32
    return %arg0, %c0_i32 : i32, i32
  }
  func.func @transform_1(%arg0: i32) -> (i32, i32) {
    %c0_i32 = arith.constant 0 : i32
    %c0_i32_0 = arith.constant 0 : i32
    %c0_i32_1 = arith.constant 0 : i32
    return %c0_i32, %c0_i32_0 : i32, i32
  }
  func.func @transform_2(%arg0: i32) -> (i32, i32) {
    %c0_i32 = arith.constant 0 : i32
    %c0_i32_0 = arith.constant 0 : i32
    %c0_i32_1 = arith.constant 0 : i32
    return %c0_i32, %c0_i32_0 : i32, i32
  }
  func.func @transform_3(%arg0: i32) -> (i32, i32) {
    %c0_i32 = arith.constant 0 : i32
    %c0_i32_0 = arith.constant 0 : i32
    %c0_i32_1 = arith.constant 0 : i32
    return %c0_i32, %c0_i32_0 : i32, i32
  }
  func.func @transform_4(%arg0: i32) -> (i32, i32) {
    %c0_i32 = arith.constant 0 : i32
    %c0_i32_0 = arith.constant 0 : i32
    %c0_i32_1 = arith.constant 0 : i32
    return %c0_i32, %c0_i32_0 : i32, i32
  }
  func.func @transform_5(%arg0: i32) -> (i32, i32) {
    %c0_i32 = arith.constant 0 : i32
    %c0_i32_0 = arith.constant 0 : i32
    %c0_i32_1 = arith.constant 0 : i32
    return %c0_i32, %c0_i32_0 : i32, i32
  }
  func.func @transform_6(%arg0: i32) -> (i32, i32) {
    %c0_i32 = arith.constant 0 : i32
    %c0_i32_0 = arith.constant 0 : i32
    %c0_i32_1 = arith.constant 0 : i32
    return %c0_i32, %c0_i32_0 : i32, i32
  }
  func.func @transform_7(%arg0: i32) -> (i32, i32) {
    %c0_i32 = arith.constant 0 : i32
    %c0_i32_0 = arith.constant 0 : i32
    return %arg0, %c0_i32 : i32, i32
  }
}

</mosaic_0001>

<llo_original>
// kernel: tpu_custom_call.1
$region0: #{tpu_custom_call.1}
  #allocation0 [shape = 'u32[]', space=smem, size = 0x4, offset = 0x4, fixed_abs, tag = 'smem constant byte address 0x4 - core index']
  #allocation1 [shape = 'u32[144,128]{1,0:T(1,128)}', space=vmem, size = 0x12000, scoped, tag = 'internal scratch']
  %s0 = inlined_call_operand.hbm [shape: f32[8,32], index: 0, kind: input, shape index: {}]
  %s1 = inlined_call_operand.hbm [shape: bf16[32,128], index: 1, kind: input, shape index: {}]
  %s2 = inlined_call_operand.hbm [shape: bf16[1,128], index: 2, kind: input, shape index: {}]
  %s3 = inlined_call_operand.hbm [shape: bf16[128,128], index: 3, kind: input, shape index: {}]
  %s4 = inlined_call_operand.hbm [shape: bf16[1,128], index: 4, kind: input, shape index: {}]
  %s5 = inlined_call_operand.hbm [shape: bf16[128,10], index: 5, kind: input, shape index: {}]
  %s6 = inlined_call_operand.hbm [shape: f32[1,10], index: 6, kind: input, shape index: {}]
  %s7 = inlined_call_operand.hbm [shape: f32[8,10], index: 7, kind: output, shape index: {}]
  %s8 = sld [smem:[#allocation0]]
  $region66: #{tpu_custom_call.1} parent=0
    _
  %s10 = ssub.s32 1, %s8
  %s11 = scalar_select 0, %s10, %s8
  $region1: #{tpu_custom_call.1} parent=0
    #allocation2 [shape = 'u8[4096]{0}', space=vmem, size = 0x1000, scoped, tag = 'input window, operand 0, single buffered']
    #allocation3 [shape = 's32[1]{0}', space=sflag, size = 0x4, scoped, tag = 'scoped memory for tpu_custom_call.1']
    #allocation4 [shape = 's32[1]{0}', space=sflag, size = 0x4, scoped, tag = 'scoped memory for tpu_custom_call.1']
    #allocation5 [shape = 'u8[8192]{0}', space=vmem, size = 0x2000, scoped, tag = 'input window, operand 1, single buffered']
    #allocation6 [shape = 's32[1]{0}', space=sflag, size = 0x4, scoped, tag = 'scoped memory for tpu_custom_call.1']
    #allocation7 [shape = 'u8[512]{0}', space=vmem, size = 0x400, scoped, tag = 'input window, operand 2, single buffered']
    #allocation8 [shape = 'u8[32768]{0}', space=vmem, size = 0x8000, scoped, tag = 'input window, operand 3, single buffered']
    #allocation9 [shape = 's32[1]{0}', space=sflag, size = 0x4, scoped, tag = 'scoped memory for tpu_custom_call.1']
    #allocation10 [shape = 'u8[512]{0}', space=vmem, size = 0x400, scoped, tag = 'input window, operand 4, single buffered']
    #allocation11 [shape = 'u8[32768]{0}', space=vmem, size = 0x8000, scoped, tag = 'input window, operand 5, single buffered']
    #allocation12 [shape = 's32[1]{0}', space=sflag, size = 0x4, scoped, tag = 'scoped memory for tpu_custom_call.1']
    #allocation13 [shape = 'u8[512]{0}', space=vmem, size = 0x400, scoped, tag = 'input window, operand 6, single buffered']
    #allocation14 [shape = 'u8[4096]{0}', space=vmem, size = 0x1000, scoped, tag = 'output window, operand 0, single buffered']
    %12 = vsyncpa [#allocation3], 0
    %13 = vsyncpa [#allocation6], 0
    %14 = vsyncpa [#allocation9], 0
    %15 = vsyncpa [#allocation12], 0
    %16 = vsyncpa [#allocation4], 0
    // Predicated region
    $region2: #{tpu_custom_call.1} parent=1 // pred_check
      _
    $region3: #{tpu_custom_call.1} parent=1 // pred_check_branch
      %18 = sbr.rel (0) target = $region5
    $region4: #{tpu_custom_call.1} parent=1 // pred_region
      %s20 = ssub.s32 128, 128
      %21 = vsyncadd [#allocation3], %s20
      %s23 = sshll.u32 [#allocation2], 4
      %s24 = int_to_ptr.vmem [resolvable:$true] %s23
      %26 = dma.hbm_to_vmem [thread:$0]  %s0, 128, %s24, [#allocation3]
    $region5: #{tpu_custom_call.1} parent=1 // pred_fallthru
      _
    // Predicated region
    $region6: #{tpu_custom_call.1} parent=1 // pred_check
      _
    $region7: #{tpu_custom_call.1} parent=1 // pred_check_branch
      %28 = sbr.rel (0) target = $region9
    $region8: #{tpu_custom_call.1} parent=1 // pred_region
      %s30 = ssub.s32 256, 256
      %31 = vsyncadd [#allocation6], %s30
      %s32 = sshll.u32 [#allocation5], 4
      %s33 = int_to_ptr.vmem [resolvable:$true] %s32
      %38 = dma.hbm_to_vmem [thread:$0]  %s1, 256, %s33, [#allocation6], 64, 64, 4
    $region9: #{tpu_custom_call.1} parent=1 // pred_fallthru
      _
    // Predicated region
    $region10: #{tpu_custom_call.1} parent=1 // pred_check
      _
    $region11: #{tpu_custom_call.1} parent=1 // pred_check_branch
      %40 = sbr.rel (0) target = $region13
    $region12: #{tpu_custom_call.1} parent=1 // pred_region
      %s42 = ssub.s32 16, 16
      %43 = vsyncadd [#allocation6], %s42
      %s45 = sshll.u32 [#allocation7], 4
      %s46 = int_to_ptr.vmem [resolvable:$true] %s45
      %48 = dma.hbm_to_vmem [thread:$0]  %s2, 16, %s46, [#allocation6]
    $region13: #{tpu_custom_call.1} parent=1 // pred_fallthru
      _
    // Predicated region
    $region14: #{tpu_custom_call.1} parent=1 // pred_check
      _
    $region15: #{tpu_custom_call.1} parent=1 // pred_check_branch
      %50 = sbr.rel (0) target = $region17
    $region16: #{tpu_custom_call.1} parent=1 // pred_region
      %s52 = ssub.s32 1024, 1024
      %53 = vsyncadd [#allocation9], %s52
      %s54 = sshll.u32 [#allocation8], 4
      %s55 = int_to_ptr.vmem [resolvable:$true] %s54
      %60 = dma.hbm_to_vmem [thread:$0]  %s3, 1024, %s55, [#allocation9], 64, 64, 4
    $region17: #{tpu_custom_call.1} parent=1 // pred_fallthru
      _
    // Predicated region
    $region18: #{tpu_custom_call.1} parent=1 // pred_check
      _
    $region19: #{tpu_custom_call.1} parent=1 // pred_check_branch
      %62 = sbr.rel (0) target = $region21
    $region20: #{tpu_custom_call.1} parent=1 // pred_region
      %s64 = ssub.s32 16, 16
      %65 = vsyncadd [#allocation9], %s64
      %s67 = sshll.u32 [#allocation10], 4
      %s68 = int_to_ptr.vmem [resolvable:$true] %s67
      %70 = dma.hbm_to_vmem [thread:$0]  %s4, 16, %s68, [#allocation9]
    $region21: #{tpu_custom_call.1} parent=1 // pred_fallthru
      _
    // Predicated region
    $region22: #{tpu_custom_call.1} parent=1 // pred_check
      _
    $region23: #{tpu_custom_call.1} parent=1 // pred_check_branch
      %72 = sbr.rel (0) target = $region25
    $region24: #{tpu_custom_call.1} parent=1 // pred_region
      %s74 = ssub.s32 1024, 1024
      %75 = vsyncadd [#allocation12], %s74
      %s76 = sshll.u32 [#allocation11], 4
      %s77 = int_to_ptr.vmem [resolvable:$true] %s76
      %82 = dma.hbm_to_vmem [thread:$0]  %s5, 1024, %s77, [#allocation12], 64, 64, 4
    $region25: #{tpu_custom_call.1} parent=1 // pred_fallthru
      _
    // Predicated region
    $region26: #{tpu_custom_call.1} parent=1 // pred_check
      _
    $region27: #{tpu_custom_call.1} parent=1 // pred_check_branch
      %84 = sbr.rel (0) target = $region29
    $region28: #{tpu_custom_call.1} parent=1 // pred_region
      %s86 = ssub.s32 16, 16
      %87 = vsyncadd [#allocation12], %s86
      %s89 = sshll.u32 [#allocation13], 4
      %s90 = int_to_ptr.vmem [resolvable:$true] %s89
      %92 = dma.hbm_to_vmem [thread:$0]  %s6, 16, %s90, [#allocation12]
    $region29: #{tpu_custom_call.1} parent=1 // pred_fallthru
      _
    // Predicated region
    $region30: #{tpu_custom_call.1} parent=1 // pred_check
      _
    $region31: #{tpu_custom_call.1} parent=1 // pred_check_branch
      %94 = sbr.rel (0) target = $region33
    $region32: #{tpu_custom_call.1} parent=1 // pred_region
      %95 = dma.done [#allocation3], 128
    $region33: #{tpu_custom_call.1} parent=1 // pred_fallthru
      _
    // Predicated region
    $region34: #{tpu_custom_call.1} parent=1 // pred_check
      _
    $region35: #{tpu_custom_call.1} parent=1 // pred_check_branch
      %97 = sbr.rel (0) target = $region37
    $region36: #{tpu_custom_call.1} parent=1 // pred_region
      %98 = dma.done [#allocation6], 256
    $region37: #{tpu_custom_call.1} parent=1 // pred_fallthru
      _
    // Predicated region
    $region38: #{tpu_custom_call.1} parent=1 // pred_check
      _
    $region39: #{tpu_custom_call.1} parent=1 // pred_check_branch
      %100 = sbr.rel (0) target = $region41
    $region40: #{tpu_custom_call.1} parent=1 // pred_region
      %101 = dma.done [#allocation6], 16
    $region41: #{tpu_custom_call.1} parent=1 // pred_fallthru
      _
    // Predicated region
    $region42: #{tpu_custom_call.1} parent=1 // pred_check
      _
    $region43: #{tpu_custom_call.1} parent=1 // pred_check_branch
      %103 = sbr.rel (0) target = $region45
    $region44: #{tpu_custom_call.1} parent=1 // pred_region
      %104 = dma.done [#allocation9], 1024
    $region45: #{tpu_custom_call.1} parent=1 // pred_fallthru
      _
    // Predicated region
    $region46: #{tpu_custom_call.1} parent=1 // pred_check
      _
    $region47: #{tpu_custom_call.1} parent=1 // pred_check_branch
      %106 = sbr.rel (0) target = $region49
    $region48: #{tpu_custom_call.1} parent=1 // pred_region
      %107 = dma.done [#allocation9], 16
    $region49: #{tpu_custom_call.1} parent=1 // pred_fallthru
      _
    // Predicated region
    $region50: #{tpu_custom_call.1} parent=1 // pred_check
      _
    $region51: #{tpu_custom_call.1} parent=1 // pred_check_branch
      %109 = sbr.rel (0) target = $region53
    $region52: #{tpu_custom_call.1} parent=1 // pred_region
      %110 = dma.done [#allocation12], 1024
    $region53: #{tpu_custom_call.1} parent=1 // pred_fallthru
      _
    // Predicated region
    $region54: #{tpu_custom_call.1} parent=1 // pred_check
      _
    $region55: #{tpu_custom_call.1} parent=1 // pred_check_branch
      %112 = sbr.rel (0) target = $region57
    $region56: #{tpu_custom_call.1} parent=1 // pred_region
      %113 = dma.done [#allocation12], 16
    $region57: #{tpu_custom_call.1} parent=1 // pred_fallthru
      _
    %v115 = vld [vmem:[#allocation2] sm:$0xff]
    %v116 = vpack.c.bf16 %v115, %v115
    %v117 = vld [vmem:[#allocation5] sm:$0xf]
    %v118 = vld [vmem:[#allocation5 + $0x4] sm:$0xf]
    %v119 = vld [vmem:[#allocation5 + $0x8] sm:$0xf]
    %v120 = vld [vmem:[#allocation5 + $0xc] sm:$0xf]
    %v125 = vunpack.c.l.b16 %v117
    %v126 = vunpack.c.l.b16 %v118
    %v127 = vunpack.c.l.b16 %v119
    %v128 = vunpack.c.l.b16 %v120
    %v129 = vpack.c.b16 %v126, %v125
    %v130 = vpack.c.b16 %v128, %v127
    %vm133 = vcmask 261120
    %v135 = vsel %vm133, %v116, 0
    %137 = vmatprep.subr.bf16.mxu0 0
    %138 = vmatpush1.bf16.msra.mxu0 %v129
    %139 = vmatprep.subr.bf16.mxu0 0
    %140 = vmatpush1.bf16.msra.mxu0 %v130
    %141 = vmatprep.subr.bf16.mxu0 0
    %142 = vmatpush1.bf16.msra.mxu0 0
    %143 = vmatprep.subr.bf16.mxu0 0
    %144 = vmatpush1.bf16.msra.mxu0 0
    %145 = vmatprep.subr.bf16.mxu0 0
    %146 = vmatpush1.bf16.msra.mxu0 0
    %147 = vmatprep.subr.bf16.mxu0 0
    %148 = vmatpush1.bf16.msra.mxu0 0
    %149 = vmatprep.subr.bf16.mxu0 0
    %150 = vmatpush1.bf16.msra.mxu0 0
    %151 = vmatprep.subr.bf16.mxu0 0
    %152 = vmatpush1.bf16.msra.mxu0 0
    %153 = vmatprep.subr.bf16.mxu0 0
    %154 = vmatpush1.bf16.msra.mxu0 0
    %155 = vmatprep.subr.bf16.mxu0 0
    %156 = vmatpush1.bf16.msra.mxu0 0
    %157 = vmatprep.subr.bf16.mxu0 0
    %158 = vmatpush1.bf16.msra.mxu0 0
    %159 = vmatprep.subr.bf16.mxu0 0
    %160 = vmatpush1.bf16.msra.mxu0 0
    %161 = vmatprep.subr.bf16.mxu0 0
    %162 = vmatpush1.bf16.msra.mxu0 0
    %163 = vmatprep.subr.bf16.mxu0 0
    %164 = vmatpush1.bf16.msra.mxu0 0
    %165 = vmatprep.subr.bf16.mxu0 0
    %166 = vmatpush1.bf16.msra.mxu0 0
    %167 = vmatprep.subr.bf16.mxu0 0
    %168 = vmatpush1.bf16.msra.mxu0 0
    %169 = vmatprep.mubr.bf16.mxu0 0
    %170 = vmatmul.mubr.bf16.gmra.mrb[0].mxu0 %v135
    %v171 = vpop.f32.mrb[0].mxu0
    %v172 = vadd.f32 0.0, %v171
    %v173 = vpop.f32.mrb[0].mxu0
    %v174 = vpop.f32.mrb[0].mxu0
    %v175 = vpop.f32.mrb[0].mxu0
    %176 = vdwg.mxu0
    %v177 = vpack.c.bf16 %v172, %v172
    %v178 = vld [vmem:[#allocation7] sm:$0x1]
    %v180 = vpack.i.b16 %v178, %v178
    %v182 = vlaneseq
    %v183 = vshrl.u32 %v182, 7
    %v184 = vsub.s32 0, %v183
    %v185 = vrot.slane %v180, %v184
    %v186 = vadd.bf16 %v177, %v185
    %v187 = vmax.bf16 %v186, 0
    %v188 = vld [vmem:[#allocation8] sm:$0xf]
    %v189 = vld [vmem:[#allocation8 + $0x4] sm:$0xf]
    %v190 = vld [vmem:[#allocation8 + $0x8] sm:$0xf]
    %v191 = vld [vmem:[#allocation8 + $0xc] sm:$0xf]
    %v192 = vld [vmem:[#allocation8 + $0x10] sm:$0xf]
    %v193 = vld [vmem:[#allocation8 + $0x14] sm:$0xf]
    %v194 = vld [vmem:[#allocation8 + $0x18] sm:$0xf]
    %v195 = vld [vmem:[#allocation8 + $0x1c] sm:$0xf]
    %v196 = vld [vmem:[#allocation8 + $0x20] sm:$0xf]
    %v197 = vld [vmem:[#allocation8 + $0x24] sm:$0xf]
    %v198 = vld [vmem:[#allocation8 + $0x28] sm:$0xf]
    %v199 = vld [vmem:[#allocation8 + $0x2c] sm:$0xf]
    %v200 = vld [vmem:[#allocation8 + $0x30] sm:$0xf]
    %v201 = vld [vmem:[#allocation8 + $0x34] sm:$0xf]
    %v202 = vld [vmem:[#allocation8 + $0x38] sm:$0xf]
    %v203 = vld [vmem:[#allocation8 + $0x3c] sm:$0xf]
    %v220 = vunpack.c.l.b16 %v188
    %v221 = vunpack.c.l.b16 %v189
    %v222 = vunpack.c.l.b16 %v190
    %v223 = vunpack.c.l.b16 %v191
    %v224 = vunpack.c.l.b16 %v192
    %v225 = vunpack.c.l.b16 %v193
    %v226 = vunpack.c.l.b16 %v194
    %v227 = vunpack.c.l.b16 %v195
    %v228 = vunpack.c.l.b16 %v196
    %v229 = vunpack.c.l.b16 %v197
    %v230 = vunpack.c.l.b16 %v198
    %v231 = vunpack.c.l.b16 %v199
    %v232 = vunpack.c.l.b16 %v200
    %v233 = vunpack.c.l.b16 %v201
    %v234 = vunpack.c.l.b16 %v202
    %v235 = vunpack.c.l.b16 %v203
    %v236 = vpack.c.b16 %v221, %v220
    %v237 = vpack.c.b16 %v223, %v222
    %v238 = vpack.c.b16 %v225, %v224
    %v239 = vpack.c.b16 %v227, %v226
    %v240 = vpack.c.b16 %v229, %v228
    %v241 = vpack.c.b16 %v231, %v230
    %v242 = vpack.c.b16 %v233, %v232
    %v243 = vpack.c.b16 %v235, %v234
    %252 = vmatprep.subr.bf16.mxu0 0
    %253 = vmatpush1.bf16.msra.mxu0 %v236
    %254 = vmatprep.subr.bf16.mxu0 0
    %255 = vmatpush1.bf16.msra.mxu0 %v237
    %256 = vmatprep.subr.bf16.mxu0 0
    %257 = vmatpush1.bf16.msra.mxu0 %v238
    %258 = vmatprep.subr.bf16.mxu0 0
    %259 = vmatpush1.bf16.msra.mxu0 %v239
    %260 = vmatprep.subr.bf16.mxu0 0
    %261 = vmatpush1.bf16.msra.mxu0 %v240
    %262 = vmatprep.subr.bf16.mxu0 0
    %263 = vmatpush1.bf16.msra.mxu0 %v241
    %264 = vmatprep.subr.bf16.mxu0 0
    %265 = vmatpush1.bf16.msra.mxu0 %v242
    %266 = vmatprep.subr.bf16.mxu0 0
    %267 = vmatpush1.bf16.msra.mxu0 %v243
    %268 = vmatprep.subr.bf16.mxu0 0
    %269 = vmatpush1.bf16.msra.mxu0 0
    %270 = vmatprep.subr.bf16.mxu0 0
    %271 = vmatpush1.bf16.msra.mxu0 0
    %272 = vmatprep.subr.bf16.mxu0 0
    %273 = vmatpush1.bf16.msra.mxu0 0
    %274 = vmatprep.subr.bf16.mxu0 0
    %275 = vmatpush1.bf16.msra.mxu0 0
    %276 = vmatprep.subr.bf16.mxu0 0
    %277 = vmatpush1.bf16.msra.mxu0 0
    %278 = vmatprep.subr.bf16.mxu0 0
    %279 = vmatpush1.bf16.msra.mxu0 0
    %280 = vmatprep.subr.bf16.mxu0 0
    %281 = vmatpush1.bf16.msra.mxu0 0
    %282 = vmatprep.subr.bf16.mxu0 0
    %283 = vmatpush1.bf16.msra.mxu0 0
    %284 = vmatprep.mubr.bf16.mxu0 0
    %285 = vmatmul.mubr.bf16.gmra.mrb[0].mxu0 %v187
    %v286 = vpop.f32.mrb[0].mxu0
    %v287 = vadd.f32 0.0, %v286
    %v288 = vpop.f32.mrb[0].mxu0
    %v289 = vpop.f32.mrb[0].mxu0
    %v290 = vpop.f32.mrb[0].mxu0
    %291 = vdwg.mxu0
    %v292 = vpack.c.bf16 %v287, %v287
    %v293 = vld [vmem:[#allocation10] sm:$0x1]
    %v295 = vpack.i.b16 %v293, %v293
    %v297 = vlaneseq
    %v298 = vshrl.u32 %v297, 7
    %v299 = vsub.s32 0, %v298
    %v300 = vrot.slane %v295, %v299
    %v301 = vadd.bf16 %v292, %v300
    %v302 = vmax.bf16 %v301, 0
    %v303 = vld [vmem:[#allocation11] sm:$0xf]
    %v304 = vld [vmem:[#allocation11 + $0x4] sm:$0xf]
    %v305 = vld [vmem:[#allocation11 + $0x8] sm:$0xf]
    %v306 = vld [vmem:[#allocation11 + $0xc] sm:$0xf]
    %v307 = vld [vmem:[#allocation11 + $0x10] sm:$0xf]
    %v308 = vld [vmem:[#allocation11 + $0x14] sm:$0xf]
    %v309 = vld [vmem:[#allocation11 + $0x18] sm:$0xf]
    %v310 = vld [vmem:[#allocation11 + $0x1c] sm:$0xf]
    %v311 = vld [vmem:[#allocation11 + $0x20] sm:$0xf]
    %v312 = vld [vmem:[#allocation11 + $0x24] sm:$0xf]
    %v313 = vld [vmem:[#allocation11 + $0x28] sm:$0xf]
    %v314 = vld [vmem:[#allocation11 + $0x2c] sm:$0xf]
    %v315 = vld [vmem:[#allocation11 + $0x30] sm:$0xf]
    %v316 = vld [vmem:[#allocation11 + $0x34] sm:$0xf]
    %v317 = vld [vmem:[#allocation11 + $0x38] sm:$0xf]
    %v318 = vld [vmem:[#allocation11 + $0x3c] sm:$0xf]
    %v319 = vld [vmem:[#allocation13] sm:$0x1]
    %v321 = vlaneseq
    %v322 = vshrl.u32 %v321, 7
    %v323 = vsub.s32 0, %v322
    %v324 = vrot.slane %v319, %v323
    %v342 = vunpack.c.l.b16 %v303
    %v343 = vunpack.c.l.b16 %v304
    %v344 = vunpack.c.l.b16 %v305
    %v345 = vunpack.c.l.b16 %v306
    %v346 = vunpack.c.l.b16 %v307
    %v347 = vunpack.c.l.b16 %v308
    %v348 = vunpack.c.l.b16 %v309
    %v349 = vunpack.c.l.b16 %v310
    %v350 = vunpack.c.l.b16 %v311
    %v351 = vunpack.c.l.b16 %v312
    %v352 = vunpack.c.l.b16 %v313
    %v353 = vunpack.c.l.b16 %v314
    %v354 = vunpack.c.l.b16 %v315
    %v355 = vunpack.c.l.b16 %v316
    %v356 = vunpack.c.l.b16 %v317
    %v357 = vunpack.c.l.b16 %v318
    %v358 = vpack.c.b16 %v343, %v342
    %v359 = vpack.c.b16 %v345, %v344
    %v360 = vpack.c.b16 %v347, %v346
    %v361 = vpack.c.b16 %v349, %v348
    %v362 = vpack.c.b16 %v351, %v350
    %v363 = vpack.c.b16 %v353, %v352
    %v364 = vpack.c.b16 %v355, %v354
    %v365 = vpack.c.b16 %v357, %v356
    %374 = vmatprep.subr.bf16.mxu0 0
    %375 = vmatpush1.bf16.msra.mxu0 %v358
    %376 = vmatprep.subr.bf16.mxu0 0
    %377 = vmatpush1.bf16.msra.mxu0 %v359
    %378 = vmatprep.subr.bf16.mxu0 0
    %379 = vmatpush1.bf16.msra.mxu0 %v360
    %380 = vmatprep.subr.bf16.mxu0 0
    %381 = vmatpush1.bf16.msra.mxu0 %v361
    %382 = vmatprep.subr.bf16.mxu0 0
    %383 = vmatpush1.bf16.msra.mxu0 %v362
    %384 = vmatprep.subr.bf16.mxu0 0
    %385 = vmatpush1.bf16.msra.mxu0 %v363
    %386 = vmatprep.subr.bf16.mxu0 0
    %387 = vmatpush1.bf16.msra.mxu0 %v364
    %388 = vmatprep.subr.bf16.mxu0 0
    %389 = vmatpush1.bf16.msra.mxu0 %v365
    %390 = vmatprep.subr.bf16.mxu0 0
    %391 = vmatpush1.bf16.msra.mxu0 0
    %392 = vmatprep.subr.bf16.mxu0 0
    %393 = vmatpush1.bf16.msra.mxu0 0
    %394 = vmatprep.subr.bf16.mxu0 0
    %395 = vmatpush1.bf16.msra.mxu0 0
    %396 = vmatprep.subr.bf16.mxu0 0
    %397 = vmatpush1.bf16.msra.mxu0 0
    %398 = vmatprep.subr.bf16.mxu0 0
    %399 = vmatpush1.bf16.msra.mxu0 0
    %400 = vmatprep.subr.bf16.mxu0 0
    %401 = vmatpush1.bf16.msra.mxu0 0
    %402 = vmatprep.subr.bf16.mxu0 0
    %403 = vmatpush1.bf16.msra.mxu0 0
    %404 = vmatprep.subr.bf16.mxu0 0
    %405 = vmatpush1.bf16.msra.mxu0 0
    %406 = vmatprep.mubr.bf16.mxu0 0
    %407 = vmatmul.mubr.bf16.gmra.mrb[0].mxu0 %v302
    %v408 = vpop.f32.mrb[0].mxu0
    %v409 = vadd.f32 %v324, %v408
    %v410 = vpop.f32.mrb[0].mxu0
    %v411 = vpop.f32.mrb[0].mxu0
    %v412 = vpop.f32.mrb[0].mxu0
    %413 = vdwg.mxu0
    %vm414 = vcmask 80896
    %415 = vst.msk [vmem:[#allocation14] sm:$0xff] %vm414, %v409
    // Predicated region
    $region58: #{tpu_custom_call.1} parent=1 // pred_check
      _
    $region59: #{tpu_custom_call.1} parent=1 // pred_check_branch
      %417 = sbr.rel (0) target = $region61
    $region60: #{tpu_custom_call.1} parent=1 // pred_region
      %s419 = ssub.s32 128, 128
      %420 = vsyncadd [#allocation4], %s419
      %s422 = sshll.u32 [#allocation14], 4
      %s423 = int_to_ptr.vmem [resolvable:$true] %s422
      %425 = dma.vmem_to_hbm [thread:$0]  %s423, 128, %s7, [#allocation4]
    $region61: #{tpu_custom_call.1} parent=1 // pred_fallthru
      _
    // Predicated region
    $region62: #{tpu_custom_call.1} parent=1 // pred_check
      _
    $region63: #{tpu_custom_call.1} parent=1 // pred_check_branch
      %427 = sbr.rel (0) target = $region65
    $region64: #{tpu_custom_call.1} parent=1 // pred_region
      %428 = dma.done [#allocation4], 128
    $region65: #{tpu_custom_call.1} parent=1 // pred_fallthru
      _
    %429 = vsyncpa [#allocation3], 1
    %430 = vsyncpa [#allocation6], 1
    %431 = vsyncpa [#allocation9], 1
    %432 = vsyncpa [#allocation12], 1
    %433 = vsyncpa [#allocation4], 1

</llo_original>
